<compile_context>
chip_gen: v7x
topology: tpu7x:2x2x1
jax: 0.10.0
libtpu: 0.0.40
codegen_flags: <defaults>
</compile_context>

<pallas_src>
import jax
import jax.numpy as jnp
from jax.experimental import pallas as pl
from jax.experimental.pallas import tpu as pltpu


def _round_up(x, m):
    return ((x + m - 1) // m) * m


def _cdiv(a, b):
    return -(-a // b)


def _choose_batch_tiling(batch, max_tile):
    """Return (tile_rows, num_tiles). tile_rows is a multiple of 8."""
    b8 = _round_up(max(batch, 1), 8)
    if b8 <= max_tile:
        # Mid-size batches: split in two so v7x's two TensorCores both work.
        if b8 >= 512:
            tb = _round_up(_cdiv(b8, 2), 8)
            return tb, 2
        return b8, 1
    n = _cdiv(b8, max_tile)
    if n % 2:
        n += 1  # even tile count -> balanced split across 2 TCs on v7x
    tb = _round_up(_cdiv(b8, n), 8)
    return tb, n


def policy_base_kernel(x_ref, w1_ref, b1_ref, w2_ref, b2_ref, o_ref):
    # Layer 1: x @ w1 + b1 -> ReLU.  x is cast to the weight dtype in vregs
    # (free VPU work); matmuls accumulate in f32; the elementwise chain
    # (bias / ReLU / tanh) stays f32 (VPU + EUP) at the real hidden width.
    x = x_ref[...].astype(w1_ref.dtype)
    h = jnp.dot(x, w1_ref[...], preferred_element_type=jnp.float32)
    h = jnp.maximum(h + b1_ref[...], 0.0)
    # Layer 2: h @ w2 + b2 -> Tanh.
    h2 = jnp.dot(h.astype(w2_ref.dtype), w2_ref[...],
                 preferred_element_type=jnp.float32)
    o_ref[...] = jnp.tanh(h2 + b2_ref[...]).astype(o_ref.dtype)


def prepare_params(w1, b1, w2, b2, *, weight_dtype=jnp.float32):
    """One-time weight cast / bias reshape.

    Call once (outside the per-step path) so policy_forward does no per-call
    HBM-side parameter prep.  Biases are kept in f32 for the VPU chain.
    """
    hidden = w1.shape[1]
    return (jnp.asarray(w1, weight_dtype),
            jnp.asarray(b1, jnp.float32).reshape(1, hidden),
            jnp.asarray(w2, weight_dtype),
            jnp.asarray(b2, jnp.float32).reshape(1, hidden))


def _ref_forward(x, w1, b1, w2, b2):
    h = jnp.maximum(x @ w1.astype(x.dtype) + b1.reshape(1, -1), 0.0)
    return jnp.tanh(h @ w2.astype(x.dtype) + b2.reshape(1, -1))


def policy_forward(x, w1, b1, w2, b2, *, max_batch_tile=1024,
                   xla_fallback_max_batch=0):
    """Policy.base forward: tanh(relu(x @ w1 + b1) @ w2 + b2).

    x:  [B, num_inputs]
    w1: [num_inputs, hidden]   b1: [hidden] or [1, hidden]
    w2: [hidden, hidden]       b2: [hidden] or [1, hidden]
    Returns [B, hidden] in x.dtype.
    """
    assert max_batch_tile % 8 == 0, "max_batch_tile must be a multiple of 8"
    out_dtype = x.dtype
    B, d_in = x.shape
    hidden = w1.shape[1]

    # Tiny-batch guard: let XLA fuse the MLP instead of paying the
    # pallas_call fixed overhead.
    if B <= xla_fallback_max_batch:
        return _ref_forward(x, w1, b1, w2, b2).astype(out_dtype)

    b1 = jnp.asarray(b1, jnp.float32).reshape(1, hidden)
    b2 = jnp.asarray(b2, jnp.float32).reshape(1, hidden)

    # Batch tiling only: features stay at their real width.
    tb, n_tiles = _choose_batch_tiling(B, max_batch_tile)
    b_p = tb * n_tiles
    if b_p != B:
        # Row padding only (small); padded rows are sliced off below.
        x_in = jnp.zeros((b_p, d_in), x.dtype).at[:B].set(x)
    else:
        x_in = x

    itemsize = lambda a: jnp.dtype(a.dtype).itemsize
    cost = pl.CostEstimate(
        flops=2 * b_p * (d_in * hidden + hidden * hidden),
        transcendentals=b_p * hidden,
        bytes_accessed=(x_in.size * itemsize(x_in)
                        + w1.size * itemsize(w1) + w2.size * itemsize(w2)
                        + (b1.size + b2.size) * 4
                        + b_p * hidden * jnp.dtype(out_dtype).itemsize))

    out = pl.pallas_call(
        policy_base_kernel,
        out_shape=jax.ShapeDtypeStruct((b_p, hidden), out_dtype),
        grid=(n_tiles,),
        in_specs=[
            pl.BlockSpec((tb, d_in), lambda i: (i, 0)),      # x: batch-tiled
            pl.BlockSpec((d_in, hidden), lambda i: (0, 0)),  # w1: resident
            pl.BlockSpec((1, hidden), lambda i: (0, 0)),     # b1: resident
            pl.BlockSpec((hidden, hidden), lambda i: (0, 0)),  # w2: resident
            pl.BlockSpec((1, hidden), lambda i: (0, 0)),     # b2: resident
        ],
        out_specs=pl.BlockSpec((tb, hidden), lambda i: (i, 0)),
        compiler_params=pltpu.CompilerParams(
            dimension_semantics=("parallel",)),
        cost_estimate=cost,
    )(x_in, w1, b1, w2, b2)

    return out if b_p == B else out[:B]


if __name__ == "__main__":
    key = jax.random.PRNGKey(0)
    kx, k1, k2, kb = jax.random.split(key, 4)

    batch = 8
    num_inputs = 16
    hidden_size = 32
    # num_outputs (DiagGaussian head) exists in __init__ but is unused in
    # forward(), so it is intentionally not part of the kernel.

    x = jax.random.normal(kx, (batch, num_inputs), jnp.float32)
    relu_gain = jnp.sqrt(2.0)
    w1 = (relu_gain * jax.random.normal(k1, (num_inputs, hidden_size),
                                        jnp.float32) / jnp.sqrt(num_inputs))
    b1 = jnp.zeros((hidden_size,), jnp.float32)
    w2 = (jax.random.normal(k2, (hidden_size, hidden_size), jnp.float32)
          / jnp.sqrt(hidden_size))
    b2 = jnp.zeros((hidden_size,), jnp.float32)

    ref = _ref_forward(x, w1, b1, w2, b2)

    # 1) f32 weights, small batch (single grid step).
    p32 = prepare_params(w1, b1, w2, b2, weight_dtype=jnp.float32)
    out_f32 = jax.block_until_ready(policy_forward(x, *p32))
    assert out_f32.shape == (batch, hidden_size)
    assert jnp.allclose(out_f32, ref, atol=1e-5, rtol=1e-5)

    # 2) bf16 weights (one-time cast via prepare_params), f32 accumulate.
    pbf = prepare_params(w1, b1, w2, b2, weight_dtype=jnp.bfloat16)
    out_bf16 = jax.block_until_ready(policy_forward(x, *pbf))
    assert out_bf16.shape == (batch, hidden_size)
    assert jnp.allclose(out_bf16, ref, atol=2e-2, rtol=2e-2)

    # 3) batch large enough to exercise the 2-tile grid + row padding
    #    (700 rows -> 2 tiles of 352, 4 padded rows sliced off).
    big_batch = 700
    xb = jax.random.normal(kb, (big_batch, num_inputs), jnp.float32)
    out_big = jax.block_until_ready(policy_forward(xb, *p32))
    ref_big = _ref_forward(xb, w1, b1, w2, b2)
    assert out_big.shape == (big_batch, hidden_size)
    assert jnp.allclose(out_big, ref_big, atol=1e-5, rtol=1e-5)

    # 4) multi-tile path above max_batch_tile (1056 rows -> 2 tiles of 528,
    #    no padding needed), exercising the even-split logic for v7x.
    xb2 = jax.random.normal(kb, (1056, num_inputs), jnp.float32)
    out_b2 = jax.block_until_ready(
        policy_forward(xb2, *p32, max_batch_tile=1024))
    assert jnp.allclose(out_b2, _ref_forward(xb2, w1, b1, w2, b2),
                        atol=1e-5, rtol=1e-5)

    print("KERNEL_OK")
</pallas_src>

<mosaic_0001>
module attributes {stable_mosaic.version = 11 : i64} {
  func.func @policy_base_kernel(%arg0: i32, %arg1: memref<8x16xf32, #tpu.memory_space<vmem>>, %arg2: memref<16x32xf32, #tpu.memory_space<vmem>>, %arg3: memref<1x32xf32, #tpu.memory_space<vmem>>, %arg4: memref<32x32xf32, #tpu.memory_space<vmem>>, %arg5: memref<1x32xf32, #tpu.memory_space<vmem>>, %arg6: memref<8x32xf32, #tpu.memory_space<vmem>>) attributes {dimension_semantics = [#tpu.dimension_semantics<parallel>], iteration_bounds = array<i64: 1>, scalar_prefetch = 0 : i64, scratch_operands = 0 : i64, tpu.core_type = #tpu.core_type<tc>, window_params = [{transform_indices = @transform_0, window_bounds = array<i64: 8, 16>}, {pipeline_mode = #tpu.pipeline_mode<synchronous>, transform_indices = @transform_1, window_bounds = array<i64: 16, 32>}, {pipeline_mode = #tpu.pipeline_mode<synchronous>, transform_indices = @transform_2, window_bounds = array<i64: 1, 32>}, {pipeline_mode = #tpu.pipeline_mode<synchronous>, transform_indices = @transform_3, window_bounds = array<i64: 32, 32>}, {pipeline_mode = #tpu.pipeline_mode<synchronous>, transform_indices = @transform_4, window_bounds = array<i64: 1, 32>}, {transform_indices = @transform_5, window_bounds = array<i64: 8, 32>}]} {
    %c0 = arith.constant 0 : index
    %c0_0 = arith.constant 0 : index
    %0 = vector.load %arg1[%c0, %c0_0] : memref<8x16xf32, #tpu.memory_space<vmem>>, vector<8x16xf32>
    %c0_1 = arith.constant 0 : index
    %c0_2 = arith.constant 0 : index
    %1 = vector.load %arg2[%c0_1, %c0_2] : memref<16x32xf32, #tpu.memory_space<vmem>>, vector<16x32xf32>
    %cst = arith.constant dense<0.000000e+00> : vector<8x32xf32>
    %2 = tpu.matmul %0, %1, %cst {dimension_numbers = #tpu.dot_dimension_numbers<[1], [0], [0], [1], [0, 0, 1, 1], [], []>} : vector<8x16xf32>, vector<16x32xf32>, vector<8x32xf32> -> vector<8x32xf32>
    %c0_3 = arith.constant 0 : index
    %c0_4 = arith.constant 0 : index
    %3 = vector.load %arg3[%c0_3, %c0_4] : memref<1x32xf32, #tpu.memory_space<vmem>>, vector<1x32xf32>
    %4 = vector.broadcast %3 : vector<1x32xf32> to vector<8x32xf32>
    %5 = arith.addf %2, %4 : vector<8x32xf32>
    %cst_5 = arith.constant 0.000000e+00 : f32
    %6 = vector.broadcast %cst_5 : f32 to vector<8x32xf32>
    %7 = arith.maximumf %5, %6 : vector<8x32xf32>
    %c0_6 = arith.constant 0 : index
    %c0_7 = arith.constant 0 : index
    %8 = vector.load %arg4[%c0_6, %c0_7] : memref<32x32xf32, #tpu.memory_space<vmem>>, vector<32x32xf32>
    %cst_8 = arith.constant dense<0.000000e+00> : vector<8x32xf32>
    %9 = tpu.matmul %7, %8, %cst_8 {dimension_numbers = #tpu.dot_dimension_numbers<[1], [0], [0], [1], [0, 0, 1, 1], [], []>} : vector<8x32xf32>, vector<32x32xf32>, vector<8x32xf32> -> vector<8x32xf32>
    %c0_9 = arith.constant 0 : index
    %c0_10 = arith.constant 0 : index
    %10 = vector.load %arg5[%c0_9, %c0_10] : memref<1x32xf32, #tpu.memory_space<vmem>>, vector<1x32xf32>
    %11 = vector.broadcast %10 : vector<1x32xf32> to vector<8x32xf32>
    %12 = arith.addf %9, %11 : vector<8x32xf32>
    %13 = math.tanh %12 : vector<8x32xf32>
    %c0_11 = arith.constant 0 : index
    %c0_12 = arith.constant 0 : index
    %14 = vector.load %arg6[%c0_11, %c0_12] : memref<8x32xf32, #tpu.memory_space<vmem>>, vector<8x32xf32>
    tpu.vector_store %arg6[%c0_11, %c0_12], %13 {strides = array<i32>} : memref<8x32xf32, #tpu.memory_space<vmem>>, vector<8x32xf32>,
    return
  }
  func.func @transform_0(%arg0: i32) -> (i32, i32) {
    %c0_i32 = arith.constant 0 : i32
    %c0_i32_0 = arith.constant 0 : i32
    return %arg0, %c0_i32 : i32, i32
  }
  func.func @transform_1(%arg0: i32) -> (i32, i32) {
    %c0_i32 = arith.constant 0 : i32
    %c0_i32_0 = arith.constant 0 : i32
    %c0_i32_1 = arith.constant 0 : i32
    return %c0_i32, %c0_i32_0 : i32, i32
  }
  func.func @transform_2(%arg0: i32) -> (i32, i32) {
    %c0_i32 = arith.constant 0 : i32
    %c0_i32_0 = arith.constant 0 : i32
    %c0_i32_1 = arith.constant 0 : i32
    return %c0_i32, %c0_i32_0 : i32, i32
  }
  func.func @transform_3(%arg0: i32) -> (i32, i32) {
    %c0_i32 = arith.constant 0 : i32
    %c0_i32_0 = arith.constant 0 : i32
    %c0_i32_1 = arith.constant 0 : i32
    return %c0_i32, %c0_i32_0 : i32, i32
  }
  func.func @transform_4(%arg0: i32) -> (i32, i32) {
    %c0_i32 = arith.constant 0 : i32
    %c0_i32_0 = arith.constant 0 : i32
    %c0_i32_1 = arith.constant 0 : i32
    return %c0_i32, %c0_i32_0 : i32, i32
  }
  func.func @transform_5(%arg0: i32) -> (i32, i32) {
    %c0_i32 = arith.constant 0 : i32
    %c0_i32_0 = arith.constant 0 : i32
    return %arg0, %c0_i32 : i32, i32
  }
}

</mosaic_0001>

<llo_original>
// kernel: tpu_custom_call.1
$region0: #{tpu_custom_call.1}
  #allocation0 [shape = 'u32[]', space=smem, size = 0x4, offset = 0x4, fixed_abs, tag = 'smem constant byte address 0x4 - core index']
  #allocation1 [shape = 'u32[144,128]{1,0:T(1,128)}', space=vmem, size = 0x12000, scoped, tag = 'internal scratch']
  %s0 = inlined_call_operand.hbm [shape: f32[8,16], index: 0, kind: input, shape index: {}]
  %s1 = inlined_call_operand.hbm [shape: f32[16,32], index: 1, kind: input, shape index: {}]
  %s2 = inlined_call_operand.vmem [shape: f32[1,32], index: 2, kind: input, shape index: {}]
  %s3 = inlined_call_operand.hbm [shape: f32[32,32], index: 3, kind: input, shape index: {}]
  %s4 = inlined_call_operand.vmem [shape: f32[1,32], index: 4, kind: input, shape index: {}]
  %s5 = inlined_call_operand.hbm [shape: f32[8,32], index: 5, kind: output, shape index: {}]
  %s6 = sld [smem:[#allocation0]]
  $region42: #{tpu_custom_call.1} parent=0
    _
  %s8 = ssub.s32 1, %s6
  %s9 = scalar_select 0, %s8, %s6
  $region1: #{tpu_custom_call.1} parent=0
    #allocation2 [shape = 'u8[4096]{0}', space=vmem, size = 0x1000, scoped, tag = 'input window, operand 0, single buffered']
    #allocation3 [shape = 's32[1]{0}', space=sflag, size = 0x4, scoped, tag = 'scoped memory for tpu_custom_call.1']
    #allocation4 [shape = 's32[1]{0}', space=sflag, size = 0x4, scoped, tag = 'scoped memory for tpu_custom_call.1']
    #allocation5 [shape = 'u8[8192]{0}', space=vmem, size = 0x2000, scoped, tag = 'input window, operand 1, single buffered']
    #allocation6 [shape = 's32[1]{0}', space=sflag, size = 0x4, scoped, tag = 'scoped memory for tpu_custom_call.1']
    #allocation7 [shape = 'u8[16384]{0}', space=vmem, size = 0x4000, scoped, tag = 'input window, operand 3, single buffered']
    #allocation8 [shape = 'u8[4096]{0}', space=vmem, size = 0x1000, scoped, tag = 'output window, operand 0, single buffered']
    %10 = vsyncpa [#allocation3], 0
    %11 = vsyncpa [#allocation6], 0
    %12 = vsyncpa [#allocation4], 0
    // Predicated region
    $region2: #{tpu_custom_call.1} parent=1 // pred_check
      _
    $region3: #{tpu_custom_call.1} parent=1 // pred_check_branch
      %14 = sbr.rel (0) target = $region5
    $region4: #{tpu_custom_call.1} parent=1 // pred_region
      %s16 = ssub.s32 128, 128
      %17 = vsyncadd [#allocation3], %s16
      %s19 = sshll.u32 [#allocation2], 4
      %s20 = int_to_ptr.vmem [resolvable:$true] %s19
      %22 = dma.hbm_to_vmem [thread:$0]  %s0, 128, %s20, [#allocation3]
    $region5: #{tpu_custom_call.1} parent=1 // pred_fallthru
      _
    // Predicated region
    $region6: #{tpu_custom_call.1} parent=1 // pred_check
      _
    $region7: #{tpu_custom_call.1} parent=1 // pred_check_branch
      %24 = sbr.rel (0) target = $region9
    $region8: #{tpu_custom_call.1} parent=1 // pred_region
      %s26 = ssub.s32 256, 256
      %27 = vsyncadd [#allocation6], %s26
      %s28 = sshll.u32 [#allocation5], 4
      %s29 = int_to_ptr.vmem [resolvable:$true] %s28
      %34 = dma.hbm_to_vmem [thread:$0]  %s1, 256, %s29, [#allocation6], 128, 128, 8
    $region9: #{tpu_custom_call.1} parent=1 // pred_fallthru
      _
    // Predicated region
    $region10: #{tpu_custom_call.1} parent=1 // pred_check
      _
    $region11: #{tpu_custom_call.1} parent=1 // pred_check_branch
      %36 = sbr.rel (0) target = $region13
    $region12: #{tpu_custom_call.1} parent=1 // pred_region
      _
    $region13: #{tpu_custom_call.1} parent=1 // pred_fallthru
      _
    // Predicated region
    $region14: #{tpu_custom_call.1} parent=1 // pred_check
      _
    $region15: #{tpu_custom_call.1} parent=1 // pred_check_branch
      %38 = sbr.rel (0) target = $region17
    $region16: #{tpu_custom_call.1} parent=1 // pred_region
      %s40 = ssub.s32 512, 512
      %41 = vsyncadd [#allocation6], %s40
      %s42 = sshll.u32 [#allocation7], 4
      %s43 = int_to_ptr.vmem [resolvable:$true] %s42
      %48 = dma.hbm_to_vmem [thread:$0]  %s3, 512, %s43, [#allocation6], 128, 128, 8
    $region17: #{tpu_custom_call.1} parent=1 // pred_fallthru
      _
    // Predicated region
    $region18: #{tpu_custom_call.1} parent=1 // pred_check
      _
    $region19: #{tpu_custom_call.1} parent=1 // pred_check_branch
      %50 = sbr.rel (0) target = $region21
    $region20: #{tpu_custom_call.1} parent=1 // pred_region
      _
    $region21: #{tpu_custom_call.1} parent=1 // pred_fallthru
      _
    // Predicated region
    $region22: #{tpu_custom_call.1} parent=1 // pred_check
      _
    $region23: #{tpu_custom_call.1} parent=1 // pred_check_branch
      %52 = sbr.rel (0) target = $region25
    $region24: #{tpu_custom_call.1} parent=1 // pred_region
      %53 = dma.done [#allocation3], 128
    $region25: #{tpu_custom_call.1} parent=1 // pred_fallthru
      _
    // Predicated region
    $region26: #{tpu_custom_call.1} parent=1 // pred_check
      _
    $region27: #{tpu_custom_call.1} parent=1 // pred_check_branch
      %55 = sbr.rel (0) target = $region29
    $region28: #{tpu_custom_call.1} parent=1 // pred_region
      %56 = dma.done [#allocation6], 256
    $region29: #{tpu_custom_call.1} parent=1 // pred_fallthru
      _
    // Predicated region
    $region30: #{tpu_custom_call.1} parent=1 // pred_check
      _
    $region31: #{tpu_custom_call.1} parent=1 // pred_check_branch
      %58 = sbr.rel (0) target = $region33
    $region32: #{tpu_custom_call.1} parent=1 // pred_region
      %59 = dma.done [#allocation6], 512
    $region33: #{tpu_custom_call.1} parent=1 // pred_fallthru
      _
    %v60 = vld [vmem:[#allocation2] sm:$0xff]
    %v61 = vld [vmem:[#allocation5] sm:$0xff]
    %v62 = vld [vmem:[#allocation5 + $0x8] sm:$0xff]
    %v63 = vld [vmem:[%s2] sm:$0x1]
    %v65 = vlaneseq
    %v66 = vshrl.u32 %v65, 7
    %v67 = vsub.s32 0, %v66
    %v68 = vrot.slane %v63, %v67
    %vm70 = vcmask 130048
    %v72 = vsel %vm70, %v60, 0
    %74 = vmatprep.subr.mxu0 0.0
    %75 = vmatpush1.msra.mxu0 %v61
    %76 = vmatprep.subr.mxu0 0.0
    %77 = vmatpush1.msra.mxu0 %v62
    %78 = vmatprep.subr.mxu0 0.0
    %79 = vmatpush1.msra.mxu0 0.0
    %80 = vmatprep.subr.mxu0 0.0
    %81 = vmatpush1.msra.mxu0 0.0
    %82 = vmatprep.subr.mxu0 0.0
    %83 = vmatpush1.msra.mxu0 0.0
    %84 = vmatprep.subr.mxu0 0.0
    %85 = vmatpush1.msra.mxu0 0.0
    %86 = vmatprep.subr.mxu0 0.0
    %87 = vmatpush1.msra.mxu0 0.0
    %88 = vmatprep.subr.mxu0 0.0
    %89 = vmatpush1.msra.mxu0 0.0
    %90 = vmatprep.subr.mxu0 0.0
    %91 = vmatpush1.msra.mxu0 0.0
    %92 = vmatprep.subr.mxu0 0.0
    %93 = vmatpush1.msra.mxu0 0.0
    %94 = vmatprep.subr.mxu0 0.0
    %95 = vmatpush1.msra.mxu0 0.0
    %96 = vmatprep.subr.mxu0 0.0
    %97 = vmatpush1.msra.mxu0 0.0
    %98 = vmatprep.subr.mxu0 0.0
    %99 = vmatpush1.msra.mxu0 0.0
    %100 = vmatprep.subr.mxu0 0.0
    %101 = vmatpush1.msra.mxu0 0.0
    %102 = vmatprep.subr.mxu0 0.0
    %103 = vmatpush1.msra.mxu0 0.0
    %104 = vmatprep.subr.mxu0 0.0
    %105 = vmatpush1.msra.mxu0 0.0
    %106 = vmatprep.subr.mxu0 0.0
    %107 = vmatpush1.msra.mxu0 0.0
    %108 = vmatprep.subr.mxu0 0.0
    %109 = vmatpush1.msra.mxu0 0.0
    %110 = vmatprep.subr.mxu0 0.0
    %111 = vmatpush1.msra.mxu0 0.0
    %112 = vmatprep.subr.mxu0 0.0
    %113 = vmatpush1.msra.mxu0 0.0
    %114 = vmatprep.subr.mxu0 0.0
    %115 = vmatpush1.msra.mxu0 0.0
    %116 = vmatprep.subr.mxu0 0.0
    %117 = vmatpush1.msra.mxu0 0.0
    %118 = vmatprep.subr.mxu0 0.0
    %119 = vmatpush1.msra.mxu0 0.0
    %120 = vmatprep.subr.mxu0 0.0
    %121 = vmatpush1.msra.mxu0 0.0
    %122 = vmatprep.subr.mxu0 0.0
    %123 = vmatpush1.msra.mxu0 0.0
    %124 = vmatprep.subr.mxu0 0.0
    %125 = vmatpush1.msra.mxu0 0.0
    %126 = vmatprep.subr.mxu0 0.0
    %127 = vmatpush1.msra.mxu0 0.0
    %128 = vmatprep.subr.mxu0 0.0
    %129 = vmatpush1.msra.mxu0 0.0
    %130 = vmatprep.subr.mxu0 0.0
    %131 = vmatpush1.msra.mxu0 0.0
    %132 = vmatprep.subr.mxu0 0.0
    %133 = vmatpush1.msra.mxu0 0.0
    %134 = vmatprep.subr.mxu0 0.0
    %135 = vmatpush1.msra.mxu0 0.0
    %136 = vmatprep.subr.mxu0 0.0
    %137 = vmatpush1.msra.mxu0 0.0
    %138 = vmatprep.mubr.f32.mxu0 0.0
    %139 = vmatmul.mubr.f32.gmra.mrb[0].mxu0 %v72
    %v140 = vpop.f32.mrb[0].mxu0
    %v141 = vadd.f32 %v68, %v140
    %v142 = vpop.f32.mrb[0].mxu0
    %143 = vdwg.mxu0
    %v144 = vmax.f32 %v141, 0.0
    %v145 = vld [vmem:[#allocation7] sm:$0xff]
    %v146 = vld [vmem:[#allocation7 + $0x8] sm:$0xff]
    %v147 = vld [vmem:[#allocation7 + $0x10] sm:$0xff]
    %v148 = vld [vmem:[#allocation7 + $0x18] sm:$0xff]
    %v149 = vld [vmem:[%s4] sm:$0x1]
    %v151 = vlaneseq
    %v152 = vshrl.u32 %v151, 7
    %v153 = vsub.s32 0, %v152
    %v154 = vrot.slane %v149, %v153
    %vm156 = vcmask 261120
    %v158 = vsel %vm156, %v144, 0
    %160 = vmatprep.subr.mxu0 0.0
    %161 = vmatpush1.msra.mxu0 %v145
    %162 = vmatprep.subr.mxu0 0.0
    %163 = vmatpush1.msra.mxu0 %v146
    %164 = vmatprep.subr.mxu0 0.0
    %165 = vmatpush1.msra.mxu0 %v147
    %166 = vmatprep.subr.mxu0 0.0
    %167 = vmatpush1.msra.mxu0 %v148
    %168 = vmatprep.subr.mxu0 0.0
    %169 = vmatpush1.msra.mxu0 0.0
    %170 = vmatprep.subr.mxu0 0.0
    %171 = vmatpush1.msra.mxu0 0.0
    %172 = vmatprep.subr.mxu0 0.0
    %173 = vmatpush1.msra.mxu0 0.0
    %174 = vmatprep.subr.mxu0 0.0
    %175 = vmatpush1.msra.mxu0 0.0
    %176 = vmatprep.subr.mxu0 0.0
    %177 = vmatpush1.msra.mxu0 0.0
    %178 = vmatprep.subr.mxu0 0.0
    %179 = vmatpush1.msra.mxu0 0.0
    %180 = vmatprep.subr.mxu0 0.0
    %181 = vmatpush1.msra.mxu0 0.0
    %182 = vmatprep.subr.mxu0 0.0
    %183 = vmatpush1.msra.mxu0 0.0
    %184 = vmatprep.subr.mxu0 0.0
    %185 = vmatpush1.msra.mxu0 0.0
    %186 = vmatprep.subr.mxu0 0.0
    %187 = vmatpush1.msra.mxu0 0.0
    %188 = vmatprep.subr.mxu0 0.0
    %189 = vmatpush1.msra.mxu0 0.0
    %190 = vmatprep.subr.mxu0 0.0
    %191 = vmatpush1.msra.mxu0 0.0
    %192 = vmatprep.subr.mxu0 0.0
    %193 = vmatpush1.msra.mxu0 0.0
    %194 = vmatprep.subr.mxu0 0.0
    %195 = vmatpush1.msra.mxu0 0.0
    %196 = vmatprep.subr.mxu0 0.0
    %197 = vmatpush1.msra.mxu0 0.0
    %198 = vmatprep.subr.mxu0 0.0
    %199 = vmatpush1.msra.mxu0 0.0
    %200 = vmatprep.subr.mxu0 0.0
    %201 = vmatpush1.msra.mxu0 0.0
    %202 = vmatprep.subr.mxu0 0.0
    %203 = vmatpush1.msra.mxu0 0.0
    %204 = vmatprep.subr.mxu0 0.0
    %205 = vmatpush1.msra.mxu0 0.0
    %206 = vmatprep.subr.mxu0 0.0
    %207 = vmatpush1.msra.mxu0 0.0
    %208 = vmatprep.subr.mxu0 0.0
    %209 = vmatpush1.msra.mxu0 0.0
    %210 = vmatprep.subr.mxu0 0.0
    %211 = vmatpush1.msra.mxu0 0.0
    %212 = vmatprep.subr.mxu0 0.0
    %213 = vmatpush1.msra.mxu0 0.0
    %214 = vmatprep.subr.mxu0 0.0
    %215 = vmatpush1.msra.mxu0 0.0
    %216 = vmatprep.subr.mxu0 0.0
    %217 = vmatpush1.msra.mxu0 0.0
    %218 = vmatprep.subr.mxu0 0.0
    %219 = vmatpush1.msra.mxu0 0.0
    %220 = vmatprep.subr.mxu0 0.0
    %221 = vmatpush1.msra.mxu0 0.0
    %222 = vmatprep.subr.mxu0 0.0
    %223 = vmatpush1.msra.mxu0 0.0
    %224 = vmatprep.mubr.f32.mxu0 0.0
    %225 = vmatmul.mubr.f32.gmra.mrb[0].mxu0 %v158
    %v226 = vpop.f32.mrb[0].mxu0
    %v227 = vadd.f32 %v154, %v226
    %v228 = vpop.f32.mrb[0].mxu0
    %229 = vdwg.mxu0
    %v230 = vtanh.pop %v227
    %231 = vst.msk [vmem:[#allocation8] sm:$0xff] %vm156, %v230
    // Predicated region
    $region34: #{tpu_custom_call.1} parent=1 // pred_check
      _
    $region35: #{tpu_custom_call.1} parent=1 // pred_check_branch
      %233 = sbr.rel (0) target = $region37
    $region36: #{tpu_custom_call.1} parent=1 // pred_region
      %s235 = ssub.s32 128, 128
      %236 = vsyncadd [#allocation4], %s235
      %s238 = sshll.u32 [#allocation8], 4
      %s239 = int_to_ptr.vmem [resolvable:$true] %s238
      %241 = dma.vmem_to_hbm [thread:$0]  %s239, 128, %s5, [#allocation4]
    $region37: #{tpu_custom_call.1} parent=1 // pred_fallthru
      _
    // Predicated region
    $region38: #{tpu_custom_call.1} parent=1 // pred_check
      _
    $region39: #{tpu_custom_call.1} parent=1 // pred_check_branch
      %243 = sbr.rel (0) target = $region41
    $region40: #{tpu_custom_call.1} parent=1 // pred_region
      %244 = dma.done [#allocation4], 128
    $region41: #{tpu_custom_call.1} parent=1 // pred_fallthru
      _
    %245 = vsyncpa [#allocation3], 1
    %246 = vsyncpa [#allocation6], 1
    %247 = vsyncpa [#allocation4], 1

</llo_original>
